<compile_context>
chip_gen: v6e
topology: v6e:2x2x1
jax: 0.10.0
libtpu: 0.0.40
codegen_flags: <defaults>
</compile_context>

<pallas_src>
import math

import jax
import jax.numpy as jnp
from jax.experimental import pallas as pl
from jax.experimental.pallas import tpu as pltpu


def _round_up(x, m):
    return ((x + m - 1) // m) * m


def _pack_factor(*dims):
    """Smallest r such that r*dim is a multiple of 128 for every dim."""
    r = 1
    for d in dims:
        r = math.lcm(r, 128 // math.gcd(128, d))
    return r


# ----------------------------------------------------------------------------
# Kernel: one row-tile of the fused 2-layer MLP.
#   x_ref  : (TM, r*nin)      native dtype (f32 or bf16) -- cast in-kernel
#   w0_ref : (r*nin, r*nhid)  bf16  block-diagonal weight (layer 0)
#   b0_ref : (1, r*nhid)      f32
#   w1_ref : (r*nhid, r*nout) bf16  block-diagonal weight (layer 1)
#   b1_ref : (1, r*nout)      f32
#   o_ref  : (TM, r*nout)     bf16
# ----------------------------------------------------------------------------
def mlp_kernel(x_ref, w0_ref, b0_ref, w1_ref, b1_ref, o_ref):
    # In-kernel cast: fuses the bf16 conversion into the kernel instead of a
    # separate XLA astype pass over x in HBM.
    x = x_ref[...].astype(w0_ref.dtype)
    # layer 0: Linear + ReLU  (MXU bf16 inputs, f32 accumulate)
    h = jnp.dot(x, w0_ref[...], preferred_element_type=jnp.float32)
    h = jnp.maximum(h + b0_ref[...], 0.0)
    # layer 1: Linear + final ReLU (with_final_activation=True)
    y = jnp.dot(h.astype(w1_ref.dtype), w1_ref[...],
                preferred_element_type=jnp.float32)
    y = jnp.maximum(y + b1_ref[...], 0.0)
    o_ref[...] = y.astype(o_ref.dtype)


def pack_params(w0, b0, w1, b1, r, compute_dtype=jnp.bfloat16):
    """One-time packing: block-diagonal weights + lane-tiled biases.

    w0: [nin, n_hid], w1: [n_hid, nout] (already transposed from torch layout),
    b0: [1, n_hid], b1: [1, nout].
    """
    eye = jnp.eye(r, dtype=jnp.float32)
    w0b = jnp.kron(eye, w0).astype(compute_dtype)          # [r*nin,  r*n_hid]
    w1b = jnp.kron(eye, w1).astype(compute_dtype)          # [r*n_hid, r*nout]
    b0r = jnp.tile(b0.reshape(1, -1), (1, r)).astype(jnp.float32)
    b1r = jnp.tile(b1.reshape(1, -1), (1, r)).astype(jnp.float32)
    return w0b, b0r, w1b, b1r


def mlp_forward(x, w0b, b0r, w1b, b1r, *, r, tile_rows=2048):
    """Fused 2-layer MLP forward.

    x: [N, nin] (any N, f32 or bf16); returns [N, nout] in bf16.
    tile_rows counts *packed* rows (each packed row = r samples), so the
    default 2048 processes 2048*r samples per grid step.
    """
    N, nin = x.shape
    rin, rhid = w0b.shape
    rout = w1b.shape[1]
    assert rin == r * nin, "packed weight does not match x feature width"
    nout = rout // r
    cdt = w0b.dtype  # compute/storage dtype of weights & output (bf16)

    # --- pad only to a multiple of r (<= r-1 rows), then free reshape -------
    pad = (-N) % r
    xr = x if pad == 0 else jnp.pad(x, ((0, pad), (0, 0)))
    np_rows = (N + pad) // r                     # packed rows (lane-dense)
    xp = xr.reshape(np_rows, rin)                # contiguous, dtype unchanged

    # Tile rounded to a multiple of 16 (bf16 native (16,128) sublane tile);
    # the last grid step may be a partial block (Pallas masks the stores).
    tile_rows = max(16, min(_round_up(tile_rows, 16), _round_up(np_rows, 16)))
    grid = (pl.cdiv(np_rows, tile_rows),)

    x_isz = jnp.dtype(xp.dtype).itemsize
    o_isz = jnp.dtype(cdt).itemsize
    w_isz = jnp.dtype(cdt).itemsize
    flops = 2 * np_rows * (rin * rhid + rhid * rout)
    bytes_accessed = (np_rows * rin * x_isz          # x in (native dtype)
                      + np_rows * rout * o_isz       # y out (bf16)
                      + (w0b.size + w1b.size) * w_isz
                      + (b0r.size + b1r.size) * 4)

    out_p = pl.pallas_call(
        mlp_kernel,
        out_shape=jax.ShapeDtypeStruct((np_rows, rout), cdt),
        grid_spec=pltpu.PrefetchScalarGridSpec(
            num_scalar_prefetch=0,
            grid=grid,
            in_specs=[
                pl.BlockSpec((tile_rows, rin), lambda i: (i, 0)),  # x tile
                pl.BlockSpec((rin, rhid), lambda i: (0, 0)),       # W0 (resident)
                pl.BlockSpec((1, rhid), lambda i: (0, 0)),         # b0
                pl.BlockSpec((rhid, rout), lambda i: (0, 0)),      # W1 (resident)
                pl.BlockSpec((1, rout), lambda i: (0, 0)),         # b1
            ],
            out_specs=pl.BlockSpec((tile_rows, rout), lambda i: (i, 0)),
        ),
        compiler_params=pltpu.CompilerParams(
            dimension_semantics=("parallel",)),
        cost_estimate=pl.CostEstimate(
            flops=flops, transcendentals=0, bytes_accessed=bytes_accessed),
    )(xp, w0b, b0r, w1b, b1r)

    # un-pack (contiguous reshape) and drop any padded / masked rows
    return out_p.reshape(np_rows * r, nout)[:N]


# ----------------------------------------------------------------------------
# Init + references
# ----------------------------------------------------------------------------
def init_params(key, nin, nout):
    # Deterministic init mimicking torch.nn.Linear (uniform +/- 1/sqrt(fan_in)).
    n_hid = nin
    k0, k1, k2, k3 = jax.random.split(key, 4)
    bound0 = 1.0 / jnp.sqrt(nin)
    bound1 = 1.0 / jnp.sqrt(n_hid)
    # stored transposed: [in_features, out_features]
    w0 = jax.random.uniform(k0, (nin, n_hid), jnp.float32, -bound0, bound0)
    b0 = jax.random.uniform(k1, (1, n_hid), jnp.float32, -bound0, bound0)
    w1 = jax.random.uniform(k2, (n_hid, nout), jnp.float32, -bound1, bound1)
    b1 = jax.random.uniform(k3, (1, nout), jnp.float32, -bound1, bound1)
    return w0, b0, w1, b1


def mlp_reference_f32(x, w0, b0, w1, b1):
    h = jnp.maximum(x @ w0 + b0, 0.0)
    return jnp.maximum(h @ w1 + b1, 0.0)


def mlp_reference_bf16(x, w0, b0, w1, b1):
    # Precision-matched reference: bf16 storage, f32 accumulation (as kernel).
    bf = jnp.bfloat16
    h = jnp.dot(x.astype(bf), w0.astype(bf), preferred_element_type=jnp.float32)
    h = jnp.maximum(h + b0, 0.0)
    y = jnp.dot(h.astype(bf), w1.astype(bf), preferred_element_type=jnp.float32)
    y = jnp.maximum(y + b1, 0.0)
    return y.astype(bf).astype(jnp.float32)


if __name__ == "__main__":
    # Small shapes consistent with the module: n_hid = nin (MLP definition).
    # N chosen so the packed-row count (250) is NOT a multiple of the tile,
    # exercising the masked partial last block and a multi-step grid.
    N, nin, nout = 1000, 32, 32
    n_hid = nin

    key = jax.random.PRNGKey(0)
    kx, kp = jax.random.split(key)
    x = jax.random.normal(kx, (N, nin), jnp.float32)
    w0, b0, w1, b1 = init_params(kp, nin, nout)

    r = _pack_factor(nin, n_hid, nout)                 # -> 4 (128-lane dense)
    w0b, b0r, w1b, b1r = pack_params(w0, b0, w1, b1, r)

    # tile_rows=64 packed rows (= 256 samples) so this small demo runs a
    # 4-step grid with one partial block; production default is 2048.
    out = mlp_forward(x, w0b, b0r, w1b, b1r, r=r, tile_rows=64)
    out = jax.block_until_ready(out)

    assert out.shape == (N, nout)
    out_f32 = out.astype(jnp.float32)

    ref_bf = mlp_reference_bf16(x, w0, b0, w1, b1)
    ref_f32 = mlp_reference_f32(x, w0, b0, w1, b1)

    # Tight check vs. precision-matched (bf16 storage, f32 accumulate) ref.
    assert jnp.allclose(out_f32, ref_bf, atol=1e-2, rtol=1e-2), (
        "mismatch vs bf16-matched reference")
    # Loose check vs. the exact f32 PyTorch-semantics reference.
    assert jnp.allclose(out_f32, ref_f32, atol=5e-2, rtol=5e-2), (
        "mismatch vs f32 reference")

    print("KERNEL_OK")
</pallas_src>

<mosaic_0001>
module attributes {stable_mosaic.version = 11 : i64} {
  func.func @mlp_kernel(%arg0: i32, %arg1: memref<64x128xf32, #tpu.memory_space<vmem>>, %arg2: memref<128x128xbf16, #tpu.memory_space<vmem>>, %arg3: memref<1x128xf32, #tpu.memory_space<vmem>>, %arg4: memref<128x128xbf16, #tpu.memory_space<vmem>>, %arg5: memref<1x128xf32, #tpu.memory_space<vmem>>, %arg6: memref<64x128xbf16, #tpu.memory_space<vmem>>) attributes {dimension_semantics = [#tpu.dimension_semantics<parallel>], iteration_bounds = array<i64: 4>, scalar_prefetch = 0 : i64, scratch_operands = 0 : i64, tpu.core_type = #tpu.core_type<tc>, window_params = [{transform_indices = @transform_0, window_bounds = array<i64: 64, 128>}, {pipeline_mode = #tpu.pipeline_mode<synchronous>, transform_indices = @transform_1, window_bounds = array<i64: 128, 128>}, {pipeline_mode = #tpu.pipeline_mode<synchronous>, transform_indices = @transform_2, window_bounds = array<i64: 1, 128>}, {pipeline_mode = #tpu.pipeline_mode<synchronous>, transform_indices = @transform_3, window_bounds = array<i64: 128, 128>}, {pipeline_mode = #tpu.pipeline_mode<synchronous>, transform_indices = @transform_4, window_bounds = array<i64: 1, 128>}, {transform_indices = @transform_5, window_bounds = array<i64: 64, 128>}]} {
    %c0 = arith.constant 0 : index
    %c0_0 = arith.constant 0 : index
    %0 = vector.load %arg1[%c0, %c0_0] : memref<64x128xf32, #tpu.memory_space<vmem>>, vector<64x128xf32>
    %1 = arith.truncf %0 : vector<64x128xf32> to vector<64x128xbf16>
    %c0_1 = arith.constant 0 : index
    %c0_2 = arith.constant 0 : index
    %2 = vector.load %arg2[%c0_1, %c0_2] : memref<128x128xbf16, #tpu.memory_space<vmem>>, vector<128x128xbf16>
    %cst = arith.constant dense<0.000000e+00> : vector<64x128xf32>
    %3 = tpu.matmul %1, %2, %cst {dimension_numbers = #tpu.dot_dimension_numbers<[1], [0], [0], [1], [0, 0, 1, 1], [], []>} : vector<64x128xbf16>, vector<128x128xbf16>, vector<64x128xf32> -> vector<64x128xf32>
    %c0_3 = arith.constant 0 : index
    %c0_4 = arith.constant 0 : index
    %4 = vector.load %arg3[%c0_3, %c0_4] : memref<1x128xf32, #tpu.memory_space<vmem>>, vector<1x128xf32>
    %5 = vector.broadcast %4 : vector<1x128xf32> to vector<64x128xf32>
    %6 = arith.addf %3, %5 : vector<64x128xf32>
    %cst_5 = arith.constant 0.000000e+00 : f32
    %7 = vector.broadcast %cst_5 : f32 to vector<64x128xf32>
    %8 = arith.maximumf %6, %7 : vector<64x128xf32>
    %9 = arith.truncf %8 : vector<64x128xf32> to vector<64x128xbf16>
    %c0_6 = arith.constant 0 : index
    %c0_7 = arith.constant 0 : index
    %10 = vector.load %arg4[%c0_6, %c0_7] : memref<128x128xbf16, #tpu.memory_space<vmem>>, vector<128x128xbf16>
    %cst_8 = arith.constant dense<0.000000e+00> : vector<64x128xf32>
    %11 = tpu.matmul %9, %10, %cst_8 {dimension_numbers = #tpu.dot_dimension_numbers<[1], [0], [0], [1], [0, 0, 1, 1], [], []>} : vector<64x128xbf16>, vector<128x128xbf16>, vector<64x128xf32> -> vector<64x128xf32>
    %c0_9 = arith.constant 0 : index
    %c0_10 = arith.constant 0 : index
    %12 = vector.load %arg5[%c0_9, %c0_10] : memref<1x128xf32, #tpu.memory_space<vmem>>, vector<1x128xf32>
    %13 = vector.broadcast %12 : vector<1x128xf32> to vector<64x128xf32>
    %14 = arith.addf %11, %13 : vector<64x128xf32>
    %cst_11 = arith.constant 0.000000e+00 : f32
    %15 = vector.broadcast %cst_11 : f32 to vector<64x128xf32>
    %16 = arith.maximumf %14, %15 : vector<64x128xf32>
    %17 = arith.truncf %16 : vector<64x128xf32> to vector<64x128xbf16>
    %c0_12 = arith.constant 0 : index
    %c0_13 = arith.constant 0 : index
    %18 = vector.load %arg6[%c0_12, %c0_13] : memref<64x128xbf16, #tpu.memory_space<vmem>>, vector<64x128xbf16>
    tpu.vector_store %arg6[%c0_12, %c0_13], %17 {strides = array<i32>} : memref<64x128xbf16, #tpu.memory_space<vmem>>, vector<64x128xbf16>,
    return
  }
  func.func @transform_0(%arg0: i32) -> (i32, i32) {
    %c0_i32 = arith.constant 0 : i32
    %c0_i32_0 = arith.constant 0 : i32
    return %arg0, %c0_i32 : i32, i32
  }
  func.func @transform_1(%arg0: i32) -> (i32, i32) {
    %c0_i32 = arith.constant 0 : i32
    %c0_i32_0 = arith.constant 0 : i32
    %c0_i32_1 = arith.constant 0 : i32
    return %c0_i32, %c0_i32_0 : i32, i32
  }
  func.func @transform_2(%arg0: i32) -> (i32, i32) {
    %c0_i32 = arith.constant 0 : i32
    %c0_i32_0 = arith.constant 0 : i32
    %c0_i32_1 = arith.constant 0 : i32
    return %c0_i32, %c0_i32_0 : i32, i32
  }
  func.func @transform_3(%arg0: i32) -> (i32, i32) {
    %c0_i32 = arith.constant 0 : i32
    %c0_i32_0 = arith.constant 0 : i32
    %c0_i32_1 = arith.constant 0 : i32
    return %c0_i32, %c0_i32_0 : i32, i32
  }
  func.func @transform_4(%arg0: i32) -> (i32, i32) {
    %c0_i32 = arith.constant 0 : i32
    %c0_i32_0 = arith.constant 0 : i32
    %c0_i32_1 = arith.constant 0 : i32
    return %c0_i32, %c0_i32_0 : i32, i32
  }
  func.func @transform_5(%arg0: i32) -> (i32, i32) {
    %c0_i32 = arith.constant 0 : i32
    %c0_i32_0 = arith.constant 0 : i32
    return %arg0, %c0_i32 : i32, i32
  }
}

</mosaic_0001>

<llo_original>
// kernel: tpu_custom_call.1
$region0: #{tpu_custom_call.1}
  #allocation0 [shape = 'u32[]', space=smem, size = 0x4, offset = 0x4, fixed_abs, tag = 'smem constant byte address 0x4 - core index']
  #allocation1 [shape = 'u32[144,128]{1,0:T(1,128)}', space=vmem, size = 0x12000, scoped, tag = 'internal scratch']
  %s0 = inlined_call_operand.hbm [shape: f32[250,128], index: 0, kind: input, shape index: {}]
  %s1 = inlined_call_operand.hbm [shape: bf16[128,128], index: 1, kind: input, shape index: {}]
  %s2 = inlined_call_operand.vmem [shape: f32[1,128], index: 2, kind: input, shape index: {}]
  %s3 = inlined_call_operand.hbm [shape: bf16[128,128], index: 3, kind: input, shape index: {}]
  %s4 = inlined_call_operand.vmem [shape: f32[1,128], index: 4, kind: input, shape index: {}]
  %s5 = inlined_call_operand.hbm [shape: bf16[250,128], index: 5, kind: output, shape index: {}]
  %s6 = sld [smem:[#allocation0]]
  $region65: #{tpu_custom_call.1} parent=0
    _
  %s8 = ssub.s32 1, %s6
  %s9 = scalar_select 0, %s8, %s6
  $region1: #{tpu_custom_call.1} parent=0
    #allocation2 [shape = 'u8[65536]{0}', space=vmem, size = 0x10000, scoped, tag = 'input window, operand 0']
    #allocation3 [shape = 's32[2]{0}', space=sflag, size = 0x8, scoped, tag = 'scoped memory for tpu_custom_call.1']
    #allocation4 [shape = 's32[2]{0}', space=sflag, size = 0x8, scoped, tag = 'scoped memory for tpu_custom_call.1']
    #allocation5 [shape = 'u8[32768]{0}', space=vmem, size = 0x8000, scoped, tag = 'input window, operand 1, single buffered']
    #allocation6 [shape = 's32[1]{0}', space=sflag, size = 0x4, scoped, tag = 'scoped memory for tpu_custom_call.1']
    #allocation7 [shape = 'u8[32768]{0}', space=vmem, size = 0x8000, scoped, tag = 'input window, operand 3, single buffered']
    #allocation8 [shape = 'u8[32768]{0}', space=vmem, size = 0x8000, scoped, tag = 'output window, operand 0']
    %10 = vsyncpa [#allocation3], 0
    %s11 = scalar_lea.sflag [#allocation3], 1
    %12 = vsyncpa %s11, 0
    %13 = vsyncpa [#allocation6], 0
    %14 = vsyncpa [#allocation4], 0
    %s15 = scalar_lea.sflag [#allocation4], 1
    %16 = vsyncpa %s15, 0
    loop: start=0, step=1, limit=6
    $region2: #{tpu_custom_call.1} parent=1 // loop_pre_header
      _
    $region3: #{tpu_custom_call.1} parent=1 // loop_header
      %s18 = sphi 0, %s22
      %p19 = scmp.ge.s32.totalorder %s18, 6
      %s28 = sphi 0, %s30
      %s31 = sphi 0, %s28
      %s32 = sphi 0, %s31
      %s48 = sphi 0, %s32
      %s52 = sphi 0, %s52
      %s54 = sphi 0, %s52
      %s55 = sphi 0, %s54
      %s69 = sphi 0, %s55
      %s73 = sphi 0, %s73
      %s75 = sphi 0, %s73
      %s76 = sphi 0, %s75
      %s90 = sphi 0, %s76
      %s94 = sphi 0, %s94
      %s96 = sphi 0, %s94
      %s97 = sphi 0, %s96
      %s111 = sphi 0, %s97
      %s115 = sphi 0, %s115
      %s117 = sphi 0, %s115
      %s118 = sphi 0, %s117
      %s132 = sphi 0, %s118
      %s138 = sphi 0, %s140
      %s141 = sphi 0, %s138
      %s142 = sphi 0, %s141
      %s158 = sphi 0, %s142
    $region4: #{tpu_custom_call.1} parent=1 // loop_header_branch
      %21 = sbr.rel (%p19) target = $region8
    $region5: #{tpu_custom_call.1} parent=1 // loop_body
      %s23 = ssub.s32 %s18, 1
      %s24 = ssub.s32 %s18, 2
      %s25 = sadd.s32 %s18, 1
      %s26 = ssub.s32 %s18, %s25
      %p27 = scmp.eq.s32.totalorder %s26, 0
      %s29 = sadd.s32 %s28, 1
      %s30 = scalar_select %p27, %s28, %s29
      %p33 = pneg %p27
      %p34 = scmp.eq.s32.totalorder %s18, 3
      %p35 = por %p33, %p34
      %p36 = scmp.ne.s32.totalorder %s28, %s31
      %p37 = scmp.eq.s32.totalorder %s18, 0
      %p38 = por %p36, %p37
      %p39 = scmp.ne.s32.totalorder %s28, %s31
      %p40 = scmp.eq.s32.totalorder %s23, 3
      %p41 = por %p39, %p40
      %p42 = scmp.ne.s32.totalorder %s31, %s32
      %p43 = scmp.eq.s32.totalorder %s23, 0
      %p44 = por %p42, %p43
      %p45 = scmp.ne.s32.totalorder %s31, %s32
      %p46 = scmp.eq.s32.totalorder %s24, 3
      %p47 = por %p45, %p46
      %p49 = scmp.ne.s32.totalorder %s32, %s48
      %p50 = scmp.eq.s32.totalorder %s24, 0
      %p51 = por %p49, %p50
      %s53 = sadd.s32 %s52, 1
      %p56 = scmp.eq.s32.totalorder %s18, 3
      %p57 = scmp.ne.s32.totalorder %s52, %s54
      %p58 = scmp.eq.s32.totalorder %s18, 0
      %p59 = por %p57, %p58
      %p60 = scmp.ne.s32.totalorder %s52, %s54
      %p61 = scmp.eq.s32.totalorder %s23, 3
      %p62 = por %p60, %p61
      %p63 = scmp.ne.s32.totalorder %s54, %s55
      %p64 = scmp.eq.s32.totalorder %s23, 0
      %p65 = por %p63, %p64
      %p66 = scmp.ne.s32.totalorder %s54, %s55
      %p67 = scmp.eq.s32.totalorder %s24, 3
      %p68 = por %p66, %p67
      %p70 = scmp.ne.s32.totalorder %s55, %s69
      %p71 = scmp.eq.s32.totalorder %s24, 0
      %p72 = por %p70, %p71
      %s74 = sadd.s32 %s73, 1
      %p77 = scmp.eq.s32.totalorder %s18, 3
      %p78 = scmp.ne.s32.totalorder %s73, %s75
      %p79 = scmp.eq.s32.totalorder %s18, 0
      %p80 = por %p78, %p79
      %p81 = scmp.ne.s32.totalorder %s73, %s75
      %p82 = scmp.eq.s32.totalorder %s23, 3
      %p83 = por %p81, %p82
      %p84 = scmp.ne.s32.totalorder %s75, %s76
      %p85 = scmp.eq.s32.totalorder %s23, 0
      %p86 = por %p84, %p85
      %p87 = scmp.ne.s32.totalorder %s75, %s76
      %p88 = scmp.eq.s32.totalorder %s24, 3
      %p89 = por %p87, %p88
      %p91 = scmp.ne.s32.totalorder %s76, %s90
      %p92 = scmp.eq.s32.totalorder %s24, 0
      %p93 = por %p91, %p92
      %s95 = sadd.s32 %s94, 1
      %p98 = scmp.eq.s32.totalorder %s18, 3
      %p99 = scmp.ne.s32.totalorder %s94, %s96
      %p100 = scmp.eq.s32.totalorder %s18, 0
      %p101 = por %p99, %p100
      %p102 = scmp.ne.s32.totalorder %s94, %s96
      %p103 = scmp.eq.s32.totalorder %s23, 3
      %p104 = por %p102, %p103
      %p105 = scmp.ne.s32.totalorder %s96, %s97
      %p106 = scmp.eq.s32.totalorder %s23, 0
      %p107 = por %p105, %p106
      %p108 = scmp.ne.s32.totalorder %s96, %s97
      %p109 = scmp.eq.s32.totalorder %s24, 3
      %p110 = por %p108, %p109
      %p112 = scmp.ne.s32.totalorder %s97, %s111
      %p113 = scmp.eq.s32.totalorder %s24, 0
      %p114 = por %p112, %p113
      %s116 = sadd.s32 %s115, 1
      %p119 = scmp.eq.s32.totalorder %s18, 3
      %p120 = scmp.ne.s32.totalorder %s115, %s117
      %p121 = scmp.eq.s32.totalorder %s18, 0
      %p122 = por %p120, %p121
      %p123 = scmp.ne.s32.totalorder %s115, %s117
      %p124 = scmp.eq.s32.totalorder %s23, 3
      %p125 = por %p123, %p124
      %p126 = scmp.ne.s32.totalorder %s117, %s118
      %p127 = scmp.eq.s32.totalorder %s23, 0
      %p128 = por %p126, %p127
      %p129 = scmp.ne.s32.totalorder %s117, %s118
      %p130 = scmp.eq.s32.totalorder %s24, 3
      %p131 = por %p129, %p130
      %p133 = scmp.ne.s32.totalorder %s118, %s132
      %p134 = scmp.eq.s32.totalorder %s24, 0
      %p135 = por %p133, %p134
      %s136 = ssub.s32 %s18, %s25
      %p137 = scmp.eq.s32.totalorder %s136, 0
      %s139 = sadd.s32 %s138, 1
      %s140 = scalar_select %p137, %s138, %s139
      %p143 = pneg %p137
      %p144 = scmp.eq.s32.totalorder %s18, 3
      %p145 = por %p143, %p144
      %p146 = scmp.ne.s32.totalorder %s138, %s141
      %p147 = scmp.eq.s32.totalorder %s18, 0
      %p148 = por %p146, %p147
      %p149 = scmp.ne.s32.totalorder %s138, %s141
      %p150 = scmp.eq.s32.totalorder %s23, 3
      %p151 = por %p149, %p150
      %p152 = scmp.ne.s32.totalorder %s141, %s142
      %p153 = scmp.eq.s32.totalorder %s23, 0
      %p154 = por %p152, %p153
      %p155 = scmp.ne.s32.totalorder %s141, %s142
      %p156 = scmp.eq.s32.totalorder %s24, 3
      %p157 = por %p155, %p156
      %p159 = scmp.ne.s32.totalorder %s142, %s158
      %p160 = scmp.eq.s32.totalorder %s24, 0
      %p161 = por %p159, %p160
      %p162 = scmp.le.s32.totalorder 1, %s18
      %p163 = scmp.lt.s32.totalorder %s18, 5
      %p164 = pnand %p162, %p163
      %p165 = pneg %p164
      // Predicated region
      $region9: #{tpu_custom_call.1} parent=5 // pred_check
        _
      $region10: #{tpu_custom_call.1} parent=5 // pred_check_branch
        %167 = sbr.rel (%p164) target = $region12
      $region11: #{tpu_custom_call.1} parent=5 // pred_region
        %s168 = ssub.s32 %s18, 1
        // Predicated region
        $region13: #{tpu_custom_call.1} parent=11 // pred_check
          %p169 = pneg %p65
        $region14: #{tpu_custom_call.1} parent=11 // pred_check_branch
          %171 = sbr.rel (%p169) target = $region16
        $region15: #{tpu_custom_call.1} parent=11 // pred_region
          %s173 = ssub.s32 1024, 1024
          %174 = vsyncadd [#allocation6], %s173
          %s175 = sshll.u32 [#allocation5], 4
          %s176 = int_to_ptr.vmem [resolvable:$true] %s175
          %181 = dma.hbm_to_vmem [thread:$0]  %s1, 1024, %s176, [#allocation6], 64, 64, 4
        $region16: #{tpu_custom_call.1} parent=11 // pred_fallthru
          _
        // Predicated region
        $region17: #{tpu_custom_call.1} parent=11 // pred_check
          %p182 = pneg %p86
        $region18: #{tpu_custom_call.1} parent=11 // pred_check_branch
          %184 = sbr.rel (%p182) target = $region20
        $region19: #{tpu_custom_call.1} parent=11 // pred_region
          _
        $region20: #{tpu_custom_call.1} parent=11 // pred_fallthru
          _
        // Predicated region
        $region21: #{tpu_custom_call.1} parent=11 // pred_check
          %p185 = pneg %p107
        $region22: #{tpu_custom_call.1} parent=11 // pred_check_branch
          %187 = sbr.rel (%p185) target = $region24
        $region23: #{tpu_custom_call.1} parent=11 // pred_region
          %s189 = ssub.s32 1024, 1024
          %190 = vsyncadd [#allocation6], %s189
          %s191 = sshll.u32 [#allocation7], 4
          %s192 = int_to_ptr.vmem [resolvable:$true] %s191
          %197 = dma.hbm_to_vmem [thread:$0]  %s3, 1024, %s192, [#allocation6], 64, 64, 4
        $region24: #{tpu_custom_call.1} parent=11 // pred_fallthru
          _
        // Predicated region
        $region25: #{tpu_custom_call.1} parent=11 // pred_check
          %p198 = pneg %p128
        $region26: #{tpu_custom_call.1} parent=11 // pred_check_branch
          %200 = sbr.rel (%p198) target = $region28
        $region27: #{tpu_custom_call.1} parent=11 // pred_region
          _
        $region28: #{tpu_custom_call.1} parent=11 // pred_fallthru
          _
      $region12: #{tpu_custom_call.1} parent=5 // pred_fallthru
        _
      %p201 = scmp.lt.s32.totalorder %s18, 4
      // Predicated region
      $region29: #{tpu_custom_call.1} parent=5 // pred_check
        %p202 = pneg %p201
      $region30: #{tpu_custom_call.1} parent=5 // pred_check_branch
        %204 = sbr.rel (%p202) target = $region32
      $region31: #{tpu_custom_call.1} parent=5 // pred_region
        // Predicated region
        $region33: #{tpu_custom_call.1} parent=31 // pred_check
          %p205 = pneg %p38
        $region34: #{tpu_custom_call.1} parent=31 // pred_check_branch
          %207 = sbr.rel (%p205) target = $region36
        $region35: #{tpu_custom_call.1} parent=31 // pred_region
          %s208 = sand.u32 %s28, 1
          %s209 = scalar_lea.sflag [#allocation3], %s208
          %s210 = sand.u32 %s28, 1
          %s211 = smul.addr %s210, 64
          %s212 = scalar_lea.vmem [#allocation2], %s211
          %s213 = smul.u32 8, %s18
          %s215 = ssub.s32 1024, 1024
          %216 = vsyncadd %s209, %s215
          %s217 = smul.addr %s213, 128
          %s218 = scalar_lea.hbm %s0, %s217
          %s219 = sshll.u32 %s212, 4
          %s220 = int_to_ptr.vmem [resolvable:$true] %s219
          %225 = dma.hbm_to_vmem [thread:$0]  %s218, 1024, %s220, %s209, 128, 128, 8
        $region36: #{tpu_custom_call.1} parent=31 // pred_fallthru
          _
      $region32: #{tpu_custom_call.1} parent=5 // pred_fallthru
        _
      %p226 = scmp.le.s32.totalorder 1, %s18
      %p227 = scmp.lt.s32.totalorder %s18, 5
      %p228 = pnand %p226, %p227
      %p229 = pneg %p228
      // Predicated region
      $region37: #{tpu_custom_call.1} parent=5 // pred_check
        _
      $region38: #{tpu_custom_call.1} parent=5 // pred_check_branch
        %231 = sbr.rel (%p228) target = $region40
      $region39: #{tpu_custom_call.1} parent=5 // pred_region
        %s232 = ssub.s32 %s18, 1
        %s233 = sand.u32 %s31, 1
        %s234 = scalar_lea.sflag [#allocation3], %s233
        %s235 = sand.u32 %s31, 1
        %s236 = smul.addr %s235, 64
        %s237 = scalar_lea.vmem [#allocation2], %s236
        // Predicated region
        $region41: #{tpu_custom_call.1} parent=39 // pred_check
          %p238 = pneg %p44
        $region42: #{tpu_custom_call.1} parent=39 // pred_check_branch
          %240 = sbr.rel (%p238) target = $region44
        $region43: #{tpu_custom_call.1} parent=39 // pred_region
          %241 = dma.done %s234, 1024
        $region44: #{tpu_custom_call.1} parent=39 // pred_fallthru
          _
        // Predicated region
        $region45: #{tpu_custom_call.1} parent=39 // pred_check
          %p242 = pneg %p65
        $region46: #{tpu_custom_call.1} parent=39 // pred_check_branch
          %244 = sbr.rel (%p242) target = $region48
        $region47: #{tpu_custom_call.1} parent=39 // pred_region
          %245 = dma.done [#allocation6], 1024
        $region48: #{tpu_custom_call.1} parent=39 // pred_fallthru
          _
        // Predicated region
        $region49: #{tpu_custom_call.1} parent=39 // pred_check
          %p246 = pneg %p107
        $region50: #{tpu_custom_call.1} parent=39 // pred_check_branch
          %248 = sbr.rel (%p246) target = $region52
        $region51: #{tpu_custom_call.1} parent=39 // pred_region
          %249 = dma.done [#allocation6], 1024
        $region52: #{tpu_custom_call.1} parent=39 // pred_fallthru
          _
        %s250 = sand.u32 %s31, 1
        %s251 = scalar_lea.sflag [#allocation3], %s250
        %s252 = sand.u32 %s31, 1
        %s253 = smul.addr %s252, 64
        %s254 = scalar_lea.vmem [#allocation2], %s253
        %p255 = pneg %p44
        %p256 = pneg %p41
        %p257 = pneg %p65
        %p258 = pneg %p62
        %p259 = pneg %p86
        %p260 = pneg %p83
        %p261 = pneg %p107
        %p262 = pneg %p104
        %p263 = pneg %p128
        %p264 = pneg %p125
        %p265 = pneg %p154
        %p266 = pneg %p151
        %s267 = sand.u32 %s141, 1
        %s268 = scalar_lea.sflag [#allocation4], %s267
        %s269 = sand.u32 %s141, 1
        %s270 = smul.addr %s269, 32
        %s271 = scalar_lea.vmem [#allocation8], %s270
        %s272 = smul.u32 8, %s23
        %s273 = smul.u32 8, %s23
        %v275 = vld [vmem:[%s237] sm:$0xff]
        %v276 = vld [vmem:[%s237 + $0x8] sm:$0xff]
        %v277 = vld [vmem:[%s237 + $0x10] sm:$0xff]
        %v278 = vld [vmem:[%s237 + $0x18] sm:$0xff]
        %v279 = vld [vmem:[%s237 + $0x20] sm:$0xff]
        %v280 = vld [vmem:[%s237 + $0x28] sm:$0xff]
        %v281 = vld [vmem:[%s237 + $0x30] sm:$0xff]
        %v282 = vld [vmem:[%s237 + $0x38] sm:$0xff]
        %v283 = vpack.c.bf16 %v276, %v275
        %v284 = vpack.c.bf16 %v278, %v277
        %v285 = vpack.c.bf16 %v280, %v279
        %v286 = vpack.c.bf16 %v282, %v281
        %v287 = vld [vmem:[#allocation5] sm:$0xf]
        %v288 = vld [vmem:[#allocation5 + $0x4] sm:$0xf]
        %v289 = vld [vmem:[#allocation5 + $0x8] sm:$0xf]
        %v290 = vld [vmem:[#allocation5 + $0xc] sm:$0xf]
        %v291 = vld [vmem:[#allocation5 + $0x10] sm:$0xf]
        %v292 = vld [vmem:[#allocation5 + $0x14] sm:$0xf]
        %v293 = vld [vmem:[#allocation5 + $0x18] sm:$0xf]
        %v294 = vld [vmem:[#allocation5 + $0x1c] sm:$0xf]
        %v295 = vld [vmem:[#allocation5 + $0x20] sm:$0xf]
        %v296 = vld [vmem:[#allocation5 + $0x24] sm:$0xf]
        %v297 = vld [vmem:[#allocation5 + $0x28] sm:$0xf]
        %v298 = vld [vmem:[#allocation5 + $0x2c] sm:$0xf]
        %v299 = vld [vmem:[#allocation5 + $0x30] sm:$0xf]
        %v300 = vld [vmem:[#allocation5 + $0x34] sm:$0xf]
        %v301 = vld [vmem:[#allocation5 + $0x38] sm:$0xf]
        %v302 = vld [vmem:[#allocation5 + $0x3c] sm:$0xf]
        %v303 = vld [vmem:[%s2] sm:$0x1]
        %v305 = vlaneseq
        %v306 = vshrl.u32 %v305, 7
        %v307 = vsub.s32 0, %v306
        %v308 = vrot.slane %v303, %v307
        %v326 = vunpack.c.l.b16 %v287
        %v327 = vunpack.c.l.b16 %v288
        %v328 = vunpack.c.l.b16 %v289
        %v329 = vunpack.c.l.b16 %v290
        %v330 = vunpack.c.l.b16 %v291
        %v331 = vunpack.c.l.b16 %v292
        %v332 = vunpack.c.l.b16 %v293
        %v333 = vunpack.c.l.b16 %v294
        %v334 = vunpack.c.l.b16 %v295
        %v335 = vunpack.c.l.b16 %v296
        %v336 = vunpack.c.l.b16 %v297
        %v337 = vunpack.c.l.b16 %v298
        %v338 = vunpack.c.l.b16 %v299
        %v339 = vunpack.c.l.b16 %v300
        %v340 = vunpack.c.l.b16 %v301
        %v341 = vunpack.c.l.b16 %v302
        %v342 = vpack.c.b16 %v327, %v326
        %v343 = vpack.c.b16 %v329, %v328
        %v344 = vpack.c.b16 %v331, %v330
        %v345 = vpack.c.b16 %v333, %v332
        %v346 = vpack.c.b16 %v335, %v334
        %v347 = vpack.c.b16 %v337, %v336
        %v348 = vpack.c.b16 %v339, %v338
        %v349 = vpack.c.b16 %v341, %v340
        %358 = vmatprep.subr.bf16.mxu0 0
        %359 = vmatpush1.bf16.msra.mxu0 %v349
        %360 = vmatprep.subr.bf16.mxu0 0
        %361 = vmatpush1.bf16.msra.mxu0 %v348
        %362 = vmatprep.subr.bf16.mxu0 0
        %363 = vmatpush1.bf16.msra.mxu0 %v347
        %364 = vmatprep.subr.bf16.mxu0 0
        %365 = vmatpush1.bf16.msra.mxu0 %v346
        %366 = vmatprep.subr.bf16.mxu0 0
        %367 = vmatpush1.bf16.msra.mxu0 %v345
        %368 = vmatprep.subr.bf16.mxu0 0
        %369 = vmatpush1.bf16.msra.mxu0 %v344
        %370 = vmatprep.subr.bf16.mxu0 0
        %371 = vmatpush1.bf16.msra.mxu0 %v343
        %372 = vmatprep.subr.bf16.mxu0 0
        %373 = vmatpush1.bf16.msra.mxu0 %v342
        %374 = vmatprep.subr.bf16.mxu0 0
        %375 = vmatpush2.bf16.msra.mxu0 0
        %376 = vmatprep.subr.bf16.mxu0 0
        %377 = vmatpush2.bf16.msra.mxu0 0
        %378 = vmatprep.subr.bf16.mxu0 0
        %379 = vmatpush2.bf16.msra.mxu0 0
        %380 = vmatprep.subr.bf16.mxu0 0
        %381 = vmatpush2.bf16.msra.mxu0 0
        %382 = vmatprep.subr.bf16.mxu0 0
        %383 = vmatpush2.bf16.msra.mxu0 0
        %384 = vmatprep.subr.bf16.mxu0 0
        %385 = vmatpush2.bf16.msra.mxu0 0
        %386 = vmatprep.subr.bf16.mxu0 0
        %387 = vmatpush2.bf16.msra.mxu0 0
        %388 = vmatprep.subr.bf16.mxu0 0
        %389 = vmatpush2.bf16.msra.mxu0 0
        %390 = vmatprep.mubr.bf16.mxu0 0
        %391 = vmatmul.mubr.bf16.gmra.mxu0 %v283
        %v392 = vpop.f32.mrf.mxu0
        %v393 = vadd.f32 %v308, %v392
        %v394 = vpop.f32.mrf.mxu0
        %v395 = vpop.f32.mrf.mxu0
        %v396 = vadd.f32 %v308, %v395
        %v397 = vpop.f32.mrf.mxu0
        %398 = vmatprep.mubr.bf16.mxu0 0
        %399 = vmatmul.mubr.bf16.gmra.mxu0 %v284
        %v400 = vpop.f32.mrf.mxu0
        %v401 = vadd.f32 %v308, %v400
        %v402 = vpop.f32.mrf.mxu0
        %v403 = vpop.f32.mrf.mxu0
        %v404 = vadd.f32 %v308, %v403
        %v405 = vpop.f32.mrf.mxu0
        %406 = vmatprep.mubr.bf16.mxu0 0
        %407 = vmatmul.mubr.bf16.gmra.mxu0 %v285
        %v408 = vpop.f32.mrf.mxu0
        %v409 = vadd.f32 %v308, %v408
        %v410 = vpop.f32.mrf.mxu0
        %v411 = vpop.f32.mrf.mxu0
        %v412 = vadd.f32 %v308, %v411
        %v413 = vpop.f32.mrf.mxu0
        %414 = vmatprep.mubr.bf16.mxu0 0
        %415 = vmatmul.mubr.bf16.gmra.mxu0 %v286
        %v416 = vpop.f32.mrf.mxu0
        %v417 = vadd.f32 %v308, %v416
        %v418 = vpop.f32.mrf.mxu0
        %v419 = vpop.f32.mrf.mxu0
        %v420 = vadd.f32 %v308, %v419
        %v421 = vpop.f32.mrf.mxu0
        %422 = vdwg.mxu0
        %v423 = vmax.f32 %v393, 0.0
        %v424 = vmax.f32 %v396, 0.0
        %v425 = vmax.f32 %v401, 0.0
        %v426 = vmax.f32 %v404, 0.0
        %v427 = vmax.f32 %v409, 0.0
        %v428 = vmax.f32 %v412, 0.0
        %v429 = vmax.f32 %v417, 0.0
        %v430 = vmax.f32 %v420, 0.0
        %v431 = vpack.c.bf16 %v424, %v423
        %v432 = vpack.c.bf16 %v426, %v425
        %v433 = vpack.c.bf16 %v428, %v427
        %v434 = vpack.c.bf16 %v430, %v429
        %v435 = vld [vmem:[#allocation7] sm:$0xf]
        %v436 = vld [vmem:[#allocation7 + $0x4] sm:$0xf]
        %v437 = vld [vmem:[#allocation7 + $0x8] sm:$0xf]
        %v438 = vld [vmem:[#allocation7 + $0xc] sm:$0xf]
        %v439 = vld [vmem:[#allocation7 + $0x10] sm:$0xf]
        %v440 = vld [vmem:[#allocation7 + $0x14] sm:$0xf]
        %v441 = vld [vmem:[#allocation7 + $0x18] sm:$0xf]
        %v442 = vld [vmem:[#allocation7 + $0x1c] sm:$0xf]
        %v443 = vld [vmem:[#allocation7 + $0x20] sm:$0xf]
        %v444 = vld [vmem:[#allocation7 + $0x24] sm:$0xf]
        %v445 = vld [vmem:[#allocation7 + $0x28] sm:$0xf]
        %v446 = vld [vmem:[#allocation7 + $0x2c] sm:$0xf]
        %v447 = vld [vmem:[#allocation7 + $0x30] sm:$0xf]
        %v448 = vld [vmem:[#allocation7 + $0x34] sm:$0xf]
        %v449 = vld [vmem:[#allocation7 + $0x38] sm:$0xf]
        %v450 = vld [vmem:[#allocation7 + $0x3c] sm:$0xf]
        %v451 = vld [vmem:[%s4] sm:$0x1]
        %v453 = vlaneseq
        %v454 = vshrl.u32 %v453, 7
        %v455 = vsub.s32 0, %v454
        %v456 = vrot.slane %v451, %v455
        %v474 = vunpack.c.l.b16 %v435
        %v475 = vunpack.c.l.b16 %v436
        %v476 = vunpack.c.l.b16 %v437
        %v477 = vunpack.c.l.b16 %v438
        %v478 = vunpack.c.l.b16 %v439
        %v479 = vunpack.c.l.b16 %v440
        %v480 = vunpack.c.l.b16 %v441
        %v481 = vunpack.c.l.b16 %v442
        %v482 = vunpack.c.l.b16 %v443
        %v483 = vunpack.c.l.b16 %v444
        %v484 = vunpack.c.l.b16 %v445
        %v485 = vunpack.c.l.b16 %v446
        %v486 = vunpack.c.l.b16 %v447
        %v487 = vunpack.c.l.b16 %v448
        %v488 = vunpack.c.l.b16 %v449
        %v489 = vunpack.c.l.b16 %v450
        %v490 = vpack.c.b16 %v475, %v474
        %v491 = vpack.c.b16 %v477, %v476
        %v492 = vpack.c.b16 %v479, %v478
        %v493 = vpack.c.b16 %v481, %v480
        %v494 = vpack.c.b16 %v483, %v482
        %v495 = vpack.c.b16 %v485, %v484
        %v496 = vpack.c.b16 %v487, %v486
        %v497 = vpack.c.b16 %v489, %v488
        %506 = vmatprep.subr.bf16.mxu0 0
        %507 = vmatpush1.bf16.msra.mxu0 %v497
        %508 = vmatprep.subr.bf16.mxu0 0
        %509 = vmatpush1.bf16.msra.mxu0 %v496
        %510 = vmatprep.subr.bf16.mxu0 0
        %511 = vmatpush1.bf16.msra.mxu0 %v495
        %512 = vmatprep.subr.bf16.mxu0 0
        %513 = vmatpush1.bf16.msra.mxu0 %v494
        %514 = vmatprep.subr.bf16.mxu0 0
        %515 = vmatpush1.bf16.msra.mxu0 %v493
        %516 = vmatprep.subr.bf16.mxu0 0
        %517 = vmatpush1.bf16.msra.mxu0 %v492
        %518 = vmatprep.subr.bf16.mxu0 0
        %519 = vmatpush1.bf16.msra.mxu0 %v491
        %520 = vmatprep.subr.bf16.mxu0 0
        %521 = vmatpush1.bf16.msra.mxu0 %v490
        %522 = vmatprep.subr.bf16.mxu0 0
        %523 = vmatpush2.bf16.msra.mxu0 0
        %524 = vmatprep.subr.bf16.mxu0 0
        %525 = vmatpush2.bf16.msra.mxu0 0
        %526 = vmatprep.subr.bf16.mxu0 0
        %527 = vmatpush2.bf16.msra.mxu0 0
        %528 = vmatprep.subr.bf16.mxu0 0
        %529 = vmatpush2.bf16.msra.mxu0 0
        %530 = vmatprep.subr.bf16.mxu0 0
        %531 = vmatpush2.bf16.msra.mxu0 0
        %532 = vmatprep.subr.bf16.mxu0 0
        %533 = vmatpush2.bf16.msra.mxu0 0
        %534 = vmatprep.subr.bf16.mxu0 0
        %535 = vmatpush2.bf16.msra.mxu0 0
        %536 = vmatprep.subr.bf16.mxu0 0
        %537 = vmatpush2.bf16.msra.mxu0 0
        %538 = vmatprep.mubr.bf16.mxu0 0
        %539 = vmatmul.mubr.bf16.gmra.mxu0 %v431
        %v540 = vpop.f32.mrf.mxu0
        %v541 = vadd.f32 %v456, %v540
        %v542 = vpop.f32.mrf.mxu0
        %v543 = vpop.f32.mrf.mxu0
        %v544 = vadd.f32 %v456, %v543
        %v545 = vpop.f32.mrf.mxu0
        %546 = vmatprep.mubr.bf16.mxu0 0
        %547 = vmatmul.mubr.bf16.gmra.mxu0 %v432
        %v548 = vpop.f32.mrf.mxu0
        %v549 = vadd.f32 %v456, %v548
        %v550 = vpop.f32.mrf.mxu0
        %v551 = vpop.f32.mrf.mxu0
        %v552 = vadd.f32 %v456, %v551
        %v553 = vpop.f32.mrf.mxu0
        %554 = vmatprep.mubr.bf16.mxu0 0
        %555 = vmatmul.mubr.bf16.gmra.mxu0 %v433
        %v556 = vpop.f32.mrf.mxu0
        %v557 = vadd.f32 %v456, %v556
        %v558 = vpop.f32.mrf.mxu0
        %v559 = vpop.f32.mrf.mxu0
        %v560 = vadd.f32 %v456, %v559
        %v561 = vpop.f32.mrf.mxu0
        %562 = vmatprep.mubr.bf16.mxu0 0
        %563 = vmatmul.mubr.bf16.gmra.mxu0 %v434
        %v564 = vpop.f32.mrf.mxu0
        %v565 = vadd.f32 %v456, %v564
        %v566 = vpop.f32.mrf.mxu0
        %v567 = vpop.f32.mrf.mxu0
        %v568 = vadd.f32 %v456, %v567
        %v569 = vpop.f32.mrf.mxu0
        %570 = vdwg.mxu0
        %v571 = vmax.f32 %v541, 0.0
        %v572 = vmax.f32 %v544, 0.0
        %v573 = vmax.f32 %v549, 0.0
        %v574 = vmax.f32 %v552, 0.0
        %v575 = vmax.f32 %v557, 0.0
        %v576 = vmax.f32 %v560, 0.0
        %v577 = vmax.f32 %v565, 0.0
        %v578 = vmax.f32 %v568, 0.0
        %v579 = vpack.c.bf16 %v572, %v571
        %v580 = vpack.c.bf16 %v574, %v573
        %v581 = vpack.c.bf16 %v576, %v575
        %v582 = vpack.c.bf16 %v578, %v577
        %v587 = vunpack.c.l.b16 %v579
        %v588 = vunpack.c.h.b16 %v579
        %v589 = vunpack.c.l.b16 %v580
        %v590 = vunpack.c.h.b16 %v580
        %v591 = vunpack.c.l.b16 %v581
        %v592 = vunpack.c.h.b16 %v581
        %v593 = vunpack.c.l.b16 %v582
        %v594 = vunpack.c.h.b16 %v582
        %v595 = vpack.c.b16 %v587, %v587
        %v596 = vpack.c.b16 %v588, %v588
        %v597 = vpack.c.b16 %v589, %v589
        %v598 = vpack.c.b16 %v590, %v590
        %v599 = vpack.c.b16 %v591, %v591
        %v600 = vpack.c.b16 %v592, %v592
        %v601 = vpack.c.b16 %v593, %v593
        %v602 = vpack.c.b16 %v594, %v594
        %611 = vst [vmem:[%s271] sm:$0xf] %v595
        %612 = vst [vmem:[%s271 + $0x4] sm:$0xf] %v596
        %613 = vst [vmem:[%s271 + $0x8] sm:$0xf] %v597
        %614 = vst [vmem:[%s271 + $0xc] sm:$0xf] %v598
        %615 = vst [vmem:[%s271 + $0x10] sm:$0xf] %v599
        %616 = vst [vmem:[%s271 + $0x14] sm:$0xf] %v600
        %617 = vst [vmem:[%s271 + $0x18] sm:$0xf] %v601
        %618 = vst [vmem:[%s271 + $0x1c] sm:$0xf] %v602
        %s619 = sand.u32 %s141, 1
        %s620 = scalar_lea.sflag [#allocation4], %s619
        %s621 = sand.u32 %s141, 1
        %s622 = smul.addr %s621, 32
        %s623 = scalar_lea.vmem [#allocation8], %s622
        // Predicated region
        $region53: #{tpu_custom_call.1} parent=39 // pred_check
          %p624 = pneg %p151
        $region54: #{tpu_custom_call.1} parent=39 // pred_check_branch
          %626 = sbr.rel (%p624) target = $region56
        $region55: #{tpu_custom_call.1} parent=39 // pred_region
          %s627 = smul.u32 8, %s23
          %s629 = ssub.s32 512, 512
          %630 = vsyncadd %s620, %s629
          %s631 = smul.addr %s627, 64
          %s632 = scalar_lea.hbm %s5, %s631
          %s633 = sshll.u32 %s623, 4
          %s634 = int_to_ptr.vmem [resolvable:$true] %s633
          %639 = dma.vmem_to_hbm [thread:$0]  %s634, 512, %s632, %s620, 64, 64, 4
        $region56: #{tpu_custom_call.1} parent=39 // pred_fallthru
          _
      $region40: #{tpu_custom_call.1} parent=5 // pred_fallthru
        _
      %p640 = scmp.le.s32.totalorder 2, %s18
      // Predicated region
      $region57: #{tpu_custom_call.1} parent=5 // pred_check
        %p641 = pneg %p640
      $region58: #{tpu_custom_call.1} parent=5 // pred_check_branch
        %643 = sbr.rel (%p641) target = $region60
      $region59: #{tpu_custom_call.1} parent=5 // pred_region
        %s644 = ssub.s32 %s18, 2
        // Predicated region
        $region61: #{tpu_custom_call.1} parent=59 // pred_check
          %p645 = pneg %p157
        $region62: #{tpu_custom_call.1} parent=59 // pred_check_branch
          %647 = sbr.rel (%p645) target = $region64
        $region63: #{tpu_custom_call.1} parent=59 // pred_region
          %s648 = sand.u32 %s142, 1
          %s649 = scalar_lea.sflag [#allocation4], %s648
          %s650 = sand.u32 %s142, 1
          %s651 = smul.addr %s650, 32
          %s652 = scalar_lea.vmem [#allocation8], %s651
          %653 = dma.done %s649, 512
        $region64: #{tpu_custom_call.1} parent=59 // pred_fallthru
          _
      $region60: #{tpu_custom_call.1} parent=5 // pred_fallthru
        _
    $region6: #{tpu_custom_call.1} parent=1 // loop_footer
      %s22 = sadd.s32 1, %s18
    $region7: #{tpu_custom_call.1} parent=1 // loop_footer_branch
      %17 = sbr.rel target = $region3
    $region8: #{tpu_custom_call.1} parent=1 // loop_exit
      _
    %654 = vsyncpa [#allocation3], 1
    %s655 = scalar_lea.sflag [#allocation3], 1
    %656 = vsyncpa %s655, 1
    %657 = vsyncpa [#allocation6], 1
    %658 = vsyncpa [#allocation4], 1
    %s659 = scalar_lea.sflag [#allocation4], 1
    %660 = vsyncpa %s659, 1

</llo_original>
